<compile_context>
chip_gen: v6e
topology: v6e:2x2x1
jax: 0.10.0
libtpu: 0.0.40
codegen_flags: <defaults>
</compile_context>

<pallas_src>
import functools
import math

import jax
import jax.numpy as jnp
from jax.experimental import pallas as pl
from jax.experimental.pallas import tpu as pltpu


def _fourier_pe_kernel(x_ref, w0t_ref, w1t_ref, b1_ref, w2t_ref, b2_ref,
                       o_ref, trig_ref, *, fourier_dim, approximate_gelu,
                       compute_dtype):
    """One (1, C, T) token tile -> (1, O, T) tile. T is the lane-dense axis."""
    x = x_ref[0]                                             # (C, T), native dtype

    # Fourier projection on the MXU: (F, C) @ (C, T) -> (F, T), f32 accumulate.
    feats = jnp.dot(w0t_ref[...], x, preferred_element_type=jnp.float32)
    feats = feats.astype(compute_dtype)                      # bf16 option (v6e/v7x)

    # cos / sin halves written straight into the VMEM scratch (no concat copy).
    # The 1/sqrt(F) scale is folded into W1 in the wrapper.
    F = fourier_dim
    trig_ref[0:F, :] = jnp.cos(feats)
    trig_ref[F:2 * F, :] = jnp.sin(feats)

    # MLP layer 1: (Hd, 2F) @ (2F, T) + b1 -> (Hd, T).
    h = jnp.dot(w1t_ref[...], trig_ref[...],
                preferred_element_type=jnp.float32) + b1_ref[...]
    # tanh GELU lowers to the EUP (free slot); approximate=False = exact erf.
    h = jax.nn.gelu(h.astype(compute_dtype), approximate=approximate_gelu)

    # MLP layer 2: (O, Hd) @ (Hd, T) + b2 -> (O, T).
    out = jnp.dot(w2t_ref[...], h, preferred_element_type=jnp.float32) + b2_ref[...]
    o_ref[0] = out.astype(o_ref.dtype)


def _choose_token_tile(total, n_slabs, target):
    """Largest lane-aligned (multiple of 128) token tile <= target.

    Prefers exact divisors of `total` (no padding) and guarantees the overall
    grid has >= 2 steps whenever possible so both v7x TensorCores get work.
    Never returns a non-lane-aligned full-extent fallback."""
    total_padded = -(-total // 128) * 128
    thw = max(128, (min(target, total_padded) // 128) * 128)
    t = thw
    while t >= 128:                      # prefer an exact divisor (no padding)
        if total % t == 0:
            thw = t
            break
        t -= 128

    def n_steps(tile):
        return n_slabs * (-(-total // tile))

    while n_steps(thw) < 2 and thw > 128:      # v7x megacore: >= 2 grid steps
        thw = max(128, ((thw // 2) // 128) * 128)
    return thw


def learnable_fourier_pe(x_nchw, w0, w1, b1, w2, b2, *, tile_hw=8192,
                         approximate_gelu=True, compute_dtype=jnp.float32,
                         out_dtype=None):
    """Learnable Fourier positional encodings, channels_first=True.

    x_nchw: (N, C, H, W) -> (N, O, H, W).
    Weights stored [in, out] (transposed w.r.t. torch nn.Linear.weight).
    approximate_gelu=True (default) is the perf config; False reproduces the
    exact-erf PyTorch forward.  compute_dtype=jnp.bfloat16 is recommended on
    v6e/v7x only (keep f32 on v5e)."""
    N, C, H, W = x_nchw.shape
    HW = H * W
    F = w0.shape[1]
    Hd = w1.shape[1]
    O = w2.shape[1]
    out_dtype = x_nchw.dtype if out_dtype is None else out_dtype
    scale = 1.0 / math.sqrt(F)

    # One-time tiny weight prep (<=32x32 transposes, scale folded into W1).
    w0t = jnp.transpose(w0)                       # (F, C)
    w1t = jnp.transpose(w1 * scale)               # (Hd, 2F)
    w2t = jnp.transpose(w2)                       # (O, Hd)
    if jnp.dtype(compute_dtype) != jnp.dtype(jnp.float32):
        w1t = w1t.astype(compute_dtype)
        w2t = w2t.astype(compute_dtype)
    b1c = b1.reshape(Hd, 1).astype(jnp.float32)
    b2c = b2.reshape(O, 1).astype(jnp.float32)

    # Layout: channels-first slab with a lane-dense token axis.
    fold_batch = (HW % 128) != 0                  # small / awkward spatial case
    if fold_batch:
        # One-time transpose folds batch into the lane axis: (1, C, N*HW).
        slab = jnp.transpose(x_nchw.reshape(N, C, HW), (1, 0, 2))
        slab = slab.reshape(1, C, N * HW)
        G, T = 1, N * HW
    else:
        slab = x_nchw.reshape(N, C, HW)           # pure view, no data movement
        G, T = N, HW

    thw = _choose_token_tile(T, G, tile_hw)
    n_tok_tiles = -(-T // thw)
    T_pad = n_tok_tiles * thw
    if T_pad != T:                                # pad instead of giant fallback block
        slab = jnp.pad(slab, ((0, 0), (0, 0), (0, T_pad - T)))

    grid = (G, n_tok_tiles)
    x_spec_kwargs = {}
    if G * n_tok_tiles >= 3:
        # Deeper input buffering hides HBM jitter (matters most on v5e).
        x_spec_kwargs = dict(pipeline_mode=pl.Buffered(3))

    kernel = functools.partial(
        _fourier_pe_kernel, fourier_dim=F,
        approximate_gelu=approximate_gelu, compute_dtype=compute_dtype)

    out_slab = pl.pallas_call(
        kernel,
        out_shape=jax.ShapeDtypeStruct((G, O, T_pad), out_dtype),
        grid=grid,
        in_specs=[
            pl.BlockSpec((1, C, thw), lambda n, t: (n, 0, t), **x_spec_kwargs),
            pl.BlockSpec((F, C), lambda n, t: (0, 0)),       # W0^T
            pl.BlockSpec((Hd, 2 * F), lambda n, t: (0, 0)),  # scaled W1^T
            pl.BlockSpec((Hd, 1), lambda n, t: (0, 0)),      # b1
            pl.BlockSpec((O, Hd), lambda n, t: (0, 0)),      # W2^T
            pl.BlockSpec((O, 1), lambda n, t: (0, 0)),       # b2
        ],
        out_specs=pl.BlockSpec((1, O, thw), lambda n, t: (n, 0, t)),
        scratch_shapes=[pltpu.VMEM((2 * F, thw), compute_dtype)],
        compiler_params=pltpu.CompilerParams(
            dimension_semantics=("parallel", "parallel"),
            vmem_limit_bytes=32 * 1024 * 1024),
    )(slab, w0t, w1t, b1c, w2t, b2c)

    out_slab = out_slab[:, :, :T]                 # drop any token padding
    if fold_batch:
        out = jnp.transpose(out_slab.reshape(O, N, HW), (1, 0, 2))
    else:
        out = out_slab
    return out.reshape(N, O, H, W)


def _reference(x_nchw, w0, w1, b1, w2, b2, approximate_gelu):
    """Pure-JAX reference mirroring the PyTorch forward (token-major)."""
    F = w0.shape[1]
    scale = 1.0 / math.sqrt(F)
    x = jnp.transpose(x_nchw, (0, 2, 3, 1))       # NHWC
    feats = x @ w0
    ff = jnp.concatenate([jnp.cos(feats) * scale, jnp.sin(feats) * scale], -1)
    h = jax.nn.gelu(ff @ w1 + b1, approximate=approximate_gelu)
    out = h @ w2 + b2
    return jnp.transpose(out, (0, 3, 1, 2))


if __name__ == "__main__":
    # Module defaults: input_shape=(32,), channels_first=True ->
    #   input_dim = 32, fourier_dim = 16, hidden_dim = 32, output_dim = 32.
    N, C, H, W = 2, 32, 8, 8
    Fdim = -(-C // 2)        # 16
    Hid = C                  # 32
    Out = C                  # 32

    key = jax.random.PRNGKey(0)
    k_x, k_w0, k_w1, k_b1, k_w2, k_b2, k_x3 = jax.random.split(key, 7)

    x = jax.random.normal(k_x, (N, C, H, W), jnp.float32)
    # Parameter shapes per the module's __init__ (normal_ Fourier projection).
    w0 = jax.random.normal(k_w0, (C, Fdim), jnp.float32)              # [in, out]
    w1 = jax.random.normal(k_w1, (2 * Fdim, Hid), jnp.float32) * 0.1
    b1 = jax.random.normal(k_b1, (Hid,), jnp.float32) * 0.1
    w2 = jax.random.normal(k_w2, (Hid, Out), jnp.float32) * 0.1
    b2 = jax.random.normal(k_b2, (Out,), jnp.float32) * 0.1

    # 1) Default perf config (tanh GELU) — small-HW batch-fold path.
    out = jax.block_until_ready(learnable_fourier_pe(x, w0, w1, b1, w2, b2))
    assert out.shape == (N, Out, H, W)
    assert jnp.allclose(out, _reference(x, w0, w1, b1, w2, b2, True),
                        atol=1e-5, rtol=1e-5), "mismatch vs tanh-GELU reference"
    # It must also stay close to the exact-erf PyTorch forward.
    assert jnp.allclose(out, _reference(x, w0, w1, b1, w2, b2, False),
                        atol=1e-2, rtol=0.0), "tanh GELU drifted from exact GELU"

    # 2) Exact PyTorch semantics (erf GELU) remain available and bit-faithful.
    out_exact = jax.block_until_ready(
        learnable_fourier_pe(x, w0, w1, b1, w2, b2, approximate_gelu=False))
    assert jnp.allclose(out_exact, _reference(x, w0, w1, b1, w2, b2, False),
                        atol=1e-5, rtol=1e-5), "mismatch vs exact-GELU reference"

    # 3) Lane-aligned spatial extent (N=1, 32x32): direct channels-first path,
    #    multi-step grid exercising Buffered(3) input pipelining.
    x3 = jax.random.normal(k_x3, (1, C, 32, 32), jnp.float32)
    out3 = jax.block_until_ready(
        learnable_fourier_pe(x3, w0, w1, b1, w2, b2, tile_hw=256))
    assert out3.shape == (1, Out, 32, 32)
    assert jnp.allclose(out3, _reference(x3, w0, w1, b1, w2, b2, True),
                        atol=1e-5, rtol=1e-5), "mismatch on direct/tiled path"

    print("KERNEL_OK")
</pallas_src>

<mosaic_0001>
module attributes {stable_mosaic.version = 11 : i64} {
  func.func @_fourier_pe_kernel(%arg0: i32, %arg1: i32, %arg2: memref<1x32x128xf32, #tpu.memory_space<vmem>>, %arg3: memref<16x32xf32, #tpu.memory_space<vmem>>, %arg4: memref<32x32xf32, #tpu.memory_space<vmem>>, %arg5: memref<32x1xf32, #tpu.memory_space<vmem>>, %arg6: memref<32x32xf32, #tpu.memory_space<vmem>>, %arg7: memref<32x1xf32, #tpu.memory_space<vmem>>, %arg8: memref<1x32x128xf32, #tpu.memory_space<vmem>>, %arg9: memref<32x128xf32, #tpu.memory_space<vmem>>) attributes {dimension_semantics = [#tpu.dimension_semantics<parallel>, #tpu.dimension_semantics<parallel>], iteration_bounds = array<i64: 1, 1>, scalar_prefetch = 0 : i64, scratch_operands = 1 : i64, tpu.core_type = #tpu.core_type<tc>, window_params = [{transform_indices = @transform_0, window_bounds = array<i64: 1, 32, 128>}, {pipeline_mode = #tpu.pipeline_mode<synchronous>, transform_indices = @transform_1, window_bounds = array<i64: 16, 32>}, {pipeline_mode = #tpu.pipeline_mode<synchronous>, transform_indices = @transform_2, window_bounds = array<i64: 32, 32>}, {pipeline_mode = #tpu.pipeline_mode<synchronous>, transform_indices = @transform_3, window_bounds = array<i64: 32, 1>}, {pipeline_mode = #tpu.pipeline_mode<synchronous>, transform_indices = @transform_4, window_bounds = array<i64: 32, 32>}, {pipeline_mode = #tpu.pipeline_mode<synchronous>, transform_indices = @transform_5, window_bounds = array<i64: 32, 1>}, {transform_indices = @transform_6, window_bounds = array<i64: 1, 32, 128>}]} {
    %c0 = arith.constant 0 : index
    %c0_0 = arith.constant 0 : index
    %c0_1 = arith.constant 0 : index
    %0 = vector.load %arg2[%c0, %c0_0, %c0_1] : memref<1x32x128xf32, #tpu.memory_space<vmem>>, vector<1x32x128xf32>
    %1 = vector.shape_cast %0 : vector<1x32x128xf32> to vector<32x128xf32>
    %c0_2 = arith.constant 0 : index
    %c0_3 = arith.constant 0 : index
    %2 = vector.load %arg3[%c0_2, %c0_3] : memref<16x32xf32, #tpu.memory_space<vmem>>, vector<16x32xf32>
    %cst = arith.constant dense<0.000000e+00> : vector<16x128xf32>
    %3 = tpu.matmul %2, %1, %cst {dimension_numbers = #tpu.dot_dimension_numbers<[1], [0], [0], [1], [0, 0, 1, 1], [], []>} : vector<16x32xf32>, vector<32x128xf32>, vector<16x128xf32> -> vector<16x128xf32>
    %4 = math.cos %3 : vector<16x128xf32>
    %c0_4 = arith.constant 0 : index
    %c0_5 = arith.constant 0 : index
    %5 = vector.load %arg9[%c0_4, %c0_5] : memref<32x128xf32, #tpu.memory_space<vmem>>, vector<16x128xf32>
    tpu.vector_store %arg9[%c0_4, %c0_5], %4 {strides = array<i32>} : memref<32x128xf32, #tpu.memory_space<vmem>>, vector<16x128xf32>,
    %6 = math.sin %3 : vector<16x128xf32>
    %c16 = arith.constant 16 : index
    %c0_6 = arith.constant 0 : index
    %7 = vector.load %arg9[%c16, %c0_6] : memref<32x128xf32, #tpu.memory_space<vmem>>, vector<16x128xf32>
    tpu.vector_store %arg9[%c16, %c0_6], %6 {strides = array<i32>} : memref<32x128xf32, #tpu.memory_space<vmem>>, vector<16x128xf32>,
    %c0_7 = arith.constant 0 : index
    %c0_8 = arith.constant 0 : index
    %8 = vector.load %arg4[%c0_7, %c0_8] : memref<32x32xf32, #tpu.memory_space<vmem>>, vector<32x32xf32>
    %c0_9 = arith.constant 0 : index
    %c0_10 = arith.constant 0 : index
    %9 = vector.load %arg9[%c0_9, %c0_10] : memref<32x128xf32, #tpu.memory_space<vmem>>, vector<32x128xf32>
    %cst_11 = arith.constant dense<0.000000e+00> : vector<32x128xf32>
    %10 = tpu.matmul %8, %9, %cst_11 {dimension_numbers = #tpu.dot_dimension_numbers<[1], [0], [0], [1], [0, 0, 1, 1], [], []>} : vector<32x32xf32>, vector<32x128xf32>, vector<32x128xf32> -> vector<32x128xf32>
    %c0_12 = arith.constant 0 : index
    %c0_13 = arith.constant 0 : index
    %11 = vector.load %arg5[%c0_12, %c0_13] : memref<32x1xf32, #tpu.memory_space<vmem>>, vector<32x1xf32>
    %12 = vector.broadcast %11 : vector<32x1xf32> to vector<32x128xf32>
    %13 = arith.addf %10, %12 : vector<32x128xf32>
    %14 = arith.mulf %13, %13 : vector<32x128xf32>
    %15 = arith.mulf %13, %14 : vector<32x128xf32>
    %cst_14 = arith.constant 4.471500e-02 : f32
    %16 = vector.broadcast %cst_14 : f32 to vector<32x128xf32>
    %17 = arith.mulf %16, %15 : vector<32x128xf32>
    %18 = arith.addf %13, %17 : vector<32x128xf32>
    %cst_15 = arith.constant 0.797884583 : f32
    %19 = vector.broadcast %cst_15 : f32 to vector<32x128xf32>
    %20 = arith.mulf %19, %18 : vector<32x128xf32>
    %21 = math.tanh %20 : vector<32x128xf32>
    %cst_16 = arith.constant 1.000000e+00 : f32
    %22 = vector.broadcast %cst_16 : f32 to vector<32x128xf32>
    %23 = arith.addf %22, %21 : vector<32x128xf32>
    %cst_17 = arith.constant 5.000000e-01 : f32
    %24 = vector.broadcast %cst_17 : f32 to vector<32x128xf32>
    %25 = arith.mulf %24, %23 : vector<32x128xf32>
    %26 = arith.mulf %13, %25 : vector<32x128xf32>
    %c0_18 = arith.constant 0 : index
    %c0_19 = arith.constant 0 : index
    %27 = vector.load %arg6[%c0_18, %c0_19] : memref<32x32xf32, #tpu.memory_space<vmem>>, vector<32x32xf32>
    %cst_20 = arith.constant dense<0.000000e+00> : vector<32x128xf32>
    %28 = tpu.matmul %27, %26, %cst_20 {dimension_numbers = #tpu.dot_dimension_numbers<[1], [0], [0], [1], [0, 0, 1, 1], [], []>} : vector<32x32xf32>, vector<32x128xf32>, vector<32x128xf32> -> vector<32x128xf32>
    %c0_21 = arith.constant 0 : index
    %c0_22 = arith.constant 0 : index
    %29 = vector.load %arg7[%c0_21, %c0_22] : memref<32x1xf32, #tpu.memory_space<vmem>>, vector<32x1xf32>
    %30 = vector.broadcast %29 : vector<32x1xf32> to vector<32x128xf32>
    %31 = arith.addf %28, %30 : vector<32x128xf32>
    %c0_23 = arith.constant 0 : index
    %c0_24 = arith.constant 0 : index
    %c0_25 = arith.constant 0 : index
    %32 = vector.load %arg8[%c0_23, %c0_24, %c0_25] : memref<1x32x128xf32, #tpu.memory_space<vmem>>, vector<1x32x128xf32>
    %33 = vector.shape_cast %32 : vector<1x32x128xf32> to vector<32x128xf32>
    %34 = vector.shape_cast %31 : vector<32x128xf32> to vector<1x32x128xf32>
    tpu.vector_store %arg8[%c0_23, %c0_24, %c0_25], %34 {strides = array<i32>} : memref<1x32x128xf32, #tpu.memory_space<vmem>>, vector<1x32x128xf32>,
    return
  }
  func.func @transform_0(%arg0: i32, %arg1: i32) -> (i32, i32, i32) {
    %c0_i32 = arith.constant 0 : i32
    %c0_i32_0 = arith.constant 0 : i32
    return %arg0, %c0_i32, %arg1 : i32, i32, i32
  }
  func.func @transform_1(%arg0: i32, %arg1: i32) -> (i32, i32) {
    %c0_i32 = arith.constant 0 : i32
    %c0_i32_0 = arith.constant 0 : i32
    %c0_i32_1 = arith.constant 0 : i32
    return %c0_i32, %c0_i32_0 : i32, i32
  }
  func.func @transform_2(%arg0: i32, %arg1: i32) -> (i32, i32) {
    %c0_i32 = arith.constant 0 : i32
    %c0_i32_0 = arith.constant 0 : i32
    %c0_i32_1 = arith.constant 0 : i32
    return %c0_i32, %c0_i32_0 : i32, i32
  }
  func.func @transform_3(%arg0: i32, %arg1: i32) -> (i32, i32) {
    %c0_i32 = arith.constant 0 : i32
    %c0_i32_0 = arith.constant 0 : i32
    %c0_i32_1 = arith.constant 0 : i32
    return %c0_i32, %c0_i32_0 : i32, i32
  }
  func.func @transform_4(%arg0: i32, %arg1: i32) -> (i32, i32) {
    %c0_i32 = arith.constant 0 : i32
    %c0_i32_0 = arith.constant 0 : i32
    %c0_i32_1 = arith.constant 0 : i32
    return %c0_i32, %c0_i32_0 : i32, i32
  }
  func.func @transform_5(%arg0: i32, %arg1: i32) -> (i32, i32) {
    %c0_i32 = arith.constant 0 : i32
    %c0_i32_0 = arith.constant 0 : i32
    %c0_i32_1 = arith.constant 0 : i32
    return %c0_i32, %c0_i32_0 : i32, i32
  }
  func.func @transform_6(%arg0: i32, %arg1: i32) -> (i32, i32, i32) {
    %c0_i32 = arith.constant 0 : i32
    %c0_i32_0 = arith.constant 0 : i32
    return %arg0, %c0_i32, %arg1 : i32, i32, i32
  }
}

</mosaic_0001>

<llo_original>
// kernel: tpu_custom_call.1
$region0: #{tpu_custom_call.1}
  #allocation0 [shape = 'u32[]', space=smem, size = 0x4, offset = 0x4, fixed_abs, tag = 'smem constant byte address 0x4 - core index']
  #allocation1 [shape = 'u32[144,128]{1,0:T(1,128)}', space=vmem, size = 0x12000, scoped, tag = 'internal scratch']
  #allocation2 [shape = 'f32[32,128]{1,0:T(8,128)}', space=vmem, size = 0x4000, scoped, tag = 'scratch operand']
  %s0 = inlined_call_operand.vmem [shape: f32[1,32,128], index: 0, kind: input, shape index: {}]
  %s1 = inlined_call_operand.hbm [shape: f32[16,32], index: 1, kind: input, shape index: {}]
  %s2 = inlined_call_operand.vmem [shape: f32[32,32], index: 2, kind: input, shape index: {}]
  %s3 = inlined_call_operand.vmem [shape: f32[32,1], index: 3, kind: input, shape index: {}]
  %s4 = inlined_call_operand.hbm [shape: f32[32,32], index: 4, kind: input, shape index: {}]
  %s5 = inlined_call_operand.vmem [shape: f32[32,1], index: 5, kind: input, shape index: {}]
  %s6 = inlined_call_operand.hbm [shape: f32[1,32,128], index: 6, kind: output, shape index: {}]
  %s7 = sld [smem:[#allocation0]]
  $region42: #{tpu_custom_call.1} parent=0
    _
  %s9 = ssub.s32 1, %s7
  %s10 = scalar_select 0, %s9, %s7
  $region1: #{tpu_custom_call.1} parent=0
    #allocation3 [shape = 'u8[8192]{0}', space=vmem, size = 0x2000, scoped, tag = 'input window, operand 1, single buffered']
    #allocation4 [shape = 's32[1]{0}', space=sflag, size = 0x4, scoped, tag = 'scoped memory for tpu_custom_call.1']
    #allocation5 [shape = 's32[1]{0}', space=sflag, size = 0x4, scoped, tag = 'scoped memory for tpu_custom_call.1']
    #allocation6 [shape = 'u8[16384]{0}', space=vmem, size = 0x4000, scoped, tag = 'input window, operand 4, single buffered']
    #allocation7 [shape = 's32[1]{0}', space=sflag, size = 0x4, scoped, tag = 'scoped memory for tpu_custom_call.1']
    #allocation8 [shape = 'u8[16384]{0}', space=vmem, size = 0x4000, scoped, tag = 'output window, operand 0, single buffered']
    %11 = vsyncpa [#allocation4], 0
    %12 = vsyncpa [#allocation7], 0
    %13 = vsyncpa [#allocation5], 0
    // Predicated region
    $region2: #{tpu_custom_call.1} parent=1 // pred_check
      _
    $region3: #{tpu_custom_call.1} parent=1 // pred_check_branch
      %15 = sbr.rel (0) target = $region5
    $region4: #{tpu_custom_call.1} parent=1 // pred_region
      _
    $region5: #{tpu_custom_call.1} parent=1 // pred_fallthru
      _
    // Predicated region
    $region6: #{tpu_custom_call.1} parent=1 // pred_check
      _
    $region7: #{tpu_custom_call.1} parent=1 // pred_check_branch
      %17 = sbr.rel (0) target = $region9
    $region8: #{tpu_custom_call.1} parent=1 // pred_region
      %s19 = ssub.s32 256, 256
      %20 = vsyncadd [#allocation4], %s19
      %s21 = sshll.u32 [#allocation3], 4
      %s22 = int_to_ptr.vmem [resolvable:$true] %s21
      %27 = dma.hbm_to_vmem [thread:$0]  %s1, 256, %s22, [#allocation4], 128, 128, 8
    $region9: #{tpu_custom_call.1} parent=1 // pred_fallthru
      _
    // Predicated region
    $region10: #{tpu_custom_call.1} parent=1 // pred_check
      _
    $region11: #{tpu_custom_call.1} parent=1 // pred_check_branch
      %29 = sbr.rel (0) target = $region13
    $region12: #{tpu_custom_call.1} parent=1 // pred_region
      _
    $region13: #{tpu_custom_call.1} parent=1 // pred_fallthru
      _
    // Predicated region
    $region14: #{tpu_custom_call.1} parent=1 // pred_check
      _
    $region15: #{tpu_custom_call.1} parent=1 // pred_check_branch
      %31 = sbr.rel (0) target = $region17
    $region16: #{tpu_custom_call.1} parent=1 // pred_region
      _
    $region17: #{tpu_custom_call.1} parent=1 // pred_fallthru
      _
    // Predicated region
    $region18: #{tpu_custom_call.1} parent=1 // pred_check
      _
    $region19: #{tpu_custom_call.1} parent=1 // pred_check_branch
      %33 = sbr.rel (0) target = $region21
    $region20: #{tpu_custom_call.1} parent=1 // pred_region
      %s35 = ssub.s32 512, 512
      %36 = vsyncadd [#allocation7], %s35
      %s37 = sshll.u32 [#allocation6], 4
      %s38 = int_to_ptr.vmem [resolvable:$true] %s37
      %43 = dma.hbm_to_vmem [thread:$0]  %s4, 512, %s38, [#allocation7], 128, 128, 8
    $region21: #{tpu_custom_call.1} parent=1 // pred_fallthru
      _
    // Predicated region
    $region22: #{tpu_custom_call.1} parent=1 // pred_check
      _
    $region23: #{tpu_custom_call.1} parent=1 // pred_check_branch
      %45 = sbr.rel (0) target = $region25
    $region24: #{tpu_custom_call.1} parent=1 // pred_region
      _
    $region25: #{tpu_custom_call.1} parent=1 // pred_fallthru
      _
    // Predicated region
    $region26: #{tpu_custom_call.1} parent=1 // pred_check
      _
    $region27: #{tpu_custom_call.1} parent=1 // pred_check_branch
      %47 = sbr.rel (0) target = $region29
    $region28: #{tpu_custom_call.1} parent=1 // pred_region
      %48 = dma.done [#allocation4], 256
    $region29: #{tpu_custom_call.1} parent=1 // pred_fallthru
      _
    // Predicated region
    $region30: #{tpu_custom_call.1} parent=1 // pred_check
      _
    $region31: #{tpu_custom_call.1} parent=1 // pred_check_branch
      %50 = sbr.rel (0) target = $region33
    $region32: #{tpu_custom_call.1} parent=1 // pred_region
      %51 = dma.done [#allocation7], 512
    $region33: #{tpu_custom_call.1} parent=1 // pred_fallthru
      _
    %v52 = vld [vmem:[%s0] sm:$0xff]
    %v53 = vld [vmem:[%s0 + $0x8] sm:$0xff]
    %v54 = vld [vmem:[%s0 + $0x10] sm:$0xff]
    %v55 = vld [vmem:[%s0 + $0x18] sm:$0xff]
    %v56 = vld [vmem:[#allocation3] sm:$0xff]
    %v57 = vld [vmem:[#allocation3 + $0x8] sm:$0xff]
    %vm58 = vcmask 261120
    %v60 = vsel %vm58, %v56, 0
    %v63 = vsel %vm58, %v57, 0
    %65 = vmatprep.subr.mxu0 0.0
    %66 = vmatpush1.msra.mxu0 0.0
    %67 = vmatprep.subr.mxu0 0.0
    %68 = vmatpush1.msra.mxu0 0.0
    %69 = vmatprep.subr.mxu0 0.0
    %70 = vmatpush1.msra.mxu0 0.0
    %71 = vmatprep.subr.mxu0 0.0
    %72 = vmatpush1.msra.mxu0 0.0
    %73 = vmatprep.subr.mxu0 0.0
    %74 = vmatpush1.msra.mxu0 0.0
    %75 = vmatprep.subr.mxu0 0.0
    %76 = vmatpush1.msra.mxu0 0.0
    %77 = vmatprep.subr.mxu0 0.0
    %78 = vmatpush1.msra.mxu0 0.0
    %79 = vmatprep.subr.mxu0 0.0
    %80 = vmatpush1.msra.mxu0 0.0
    %81 = vmatprep.subr.mxu0 0.0
    %82 = vmatpush1.msra.mxu0 0.0
    %83 = vmatprep.subr.mxu0 0.0
    %84 = vmatpush1.msra.mxu0 0.0
    %85 = vmatprep.subr.mxu0 0.0
    %86 = vmatpush1.msra.mxu0 0.0
    %87 = vmatprep.subr.mxu0 0.0
    %88 = vmatpush1.msra.mxu0 0.0
    %89 = vmatprep.subr.mxu0 0.0
    %90 = vmatpush1.msra.mxu0 %v55
    %91 = vmatprep.subr.mxu0 0.0
    %92 = vmatpush1.msra.mxu0 %v54
    %93 = vmatprep.subr.mxu0 0.0
    %94 = vmatpush1.msra.mxu0 %v53
    %95 = vmatprep.subr.mxu0 0.0
    %96 = vmatpush1.msra.mxu0 %v52
    %97 = vmatprep.subr.mxu0 0.0
    %98 = vmatpush2.msra.mxu0 0.0
    %99 = vmatprep.subr.mxu0 0.0
    %100 = vmatpush2.msra.mxu0 0.0
    %101 = vmatprep.subr.mxu0 0.0
    %102 = vmatpush2.msra.mxu0 0.0
    %103 = vmatprep.subr.mxu0 0.0
    %104 = vmatpush2.msra.mxu0 0.0
    %105 = vmatprep.subr.mxu0 0.0
    %106 = vmatpush2.msra.mxu0 0.0
    %107 = vmatprep.subr.mxu0 0.0
    %108 = vmatpush2.msra.mxu0 0.0
    %109 = vmatprep.subr.mxu0 0.0
    %110 = vmatpush2.msra.mxu0 0.0
    %111 = vmatprep.subr.mxu0 0.0
    %112 = vmatpush2.msra.mxu0 0.0
    %113 = vmatprep.subr.mxu0 0.0
    %114 = vmatpush2.msra.mxu0 0.0
    %115 = vmatprep.subr.mxu0 0.0
    %116 = vmatpush2.msra.mxu0 0.0
    %117 = vmatprep.subr.mxu0 0.0
    %118 = vmatpush2.msra.mxu0 0.0
    %119 = vmatprep.subr.mxu0 0.0
    %120 = vmatpush2.msra.mxu0 0.0
    %121 = vmatprep.subr.mxu0 0.0
    %122 = vmatpush2.msra.mxu0 0.0
    %123 = vmatprep.subr.mxu0 0.0
    %124 = vmatpush2.msra.mxu0 0.0
    %125 = vmatprep.subr.mxu0 0.0
    %126 = vmatpush2.msra.mxu0 0.0
    %127 = vmatprep.subr.mxu0 0.0
    %128 = vmatpush2.msra.mxu0 0.0
    %129 = vmatprep.mubr.f32.mxu0 0.0
    %130 = vmatmul.mubr.f32.gmra.mxu0 %v60
    %v131 = vpop.f32.mrf.mxu0
    %v132 = vadd.f32 0.0, %v131
    %v133 = vpop.f32.mrf.mxu0
    %134 = vmatprep.mubr.f32.mxu0 0.0
    %135 = vmatmul.mubr.f32.gmra.mxu0 %v63
    %v136 = vpop.f32.mrf.mxu0
    %v137 = vadd.f32 0.0, %v136
    %v138 = vpop.f32.mrf.mxu0
    %139 = vdwg.mxu0
    %v140 = vand.u32 2147483647, %v132
    %vm141 = vcmp.le.f32.partialorder %v140, 0.7853982
    %vm142 = vcmp.lt.s32.totalorder %v132, 0
    %v143 = vand.u32 %v132, 2139095040
    %v144 = vshrl.u32 %v143, 23
    %v145 = vsub.s32 %v144, 127
    %v146 = vand.u32 2147483647, %v132
    %v147 = vand.u32 %v146, 8388607
    %v148 = vor.u32 %v147, 8388608
    %v149 = vsub.s32 0, %v148
    %v150 = vadd.s32 %v145, 1
    %vm151 = vcmp.gt.s32.totalorder %v150, 0
    %v152 = vsel %vm151, %v150, 0
    %v153 = vshrl.u32 %v152, 5
    %v154 = vand.u32 %v152, 31
    %v155 = vsub.s32 32, %v154
    %v156 = vshrl.u32 683565275, %v155
    %v157 = vshll.u32 683565275, %v154
    %v158 = vshrl.u32 2475754826, %v155
    %v159 = vor.u32 %v157, %v158
    %v160 = vshll.u32 2475754826, %v154
    %v161 = vshrl.u32 2131351028, %v155
    %v162 = vor.u32 %v160, %v161
    %v163 = vshll.u32 2131351028, %v154
    %v164 = vshrl.u32 2102212464, %v155
    %v165 = vor.u32 %v163, %v164
    %v166 = vshll.u32 2102212464, %v154
    %v167 = vshrl.u32 920167782, %v155
    %v168 = vor.u32 %v166, %v167
    %v169 = vshll.u32 920167782, %v154
    %v170 = vshrl.u32 1326507024, %v155
    %v171 = vor.u32 %v169, %v170
    %vm172 = vcmp.lt.s32.totalorder %v153, 1
    %vm173 = vcmp.lt.s32.totalorder %v153, 2
    %vm174 = vcmp.lt.s32.totalorder %v153, 3
    %vm175 = vcmp.lt.s32.totalorder %v153, 4
    %v176 = vsel %vm172, %v156, %v159
    %v177 = vsel %vm175, %v165, 2102212464
    %v178 = vsel %vm174, %v162, %v177
    %v179 = vsel %vm173, %v176, %v178
    %v180 = vsel %vm172, %v159, %v162
    %v181 = vsel %vm175, %v168, 920167782
    %v182 = vsel %vm174, %v165, %v181
    %v183 = vsel %vm173, %v180, %v182
    %v184 = vsel %vm172, %v162, %v165
    %v185 = vsel %vm175, %v171, 1326507024
    %v186 = vsel %vm174, %v168, %v185
    %v187 = vsel %vm173, %v184, %v186
    %v188 = vshll.u32 %v148, 8
    %v189 = vmul.u32.u64.compose %v188, %v187
    %v190 = vextract.low.u32 %v189
    %v191 = vextract.high.u32 %v189
    %v192 = vmul.u32.u64.compose %v188, %v183
    %v193 = vextract.low.u32 %v192
    %v194 = vextract.high.u32 %v192
    %v195 = vmul.u32 %v188, %v179
    %v196 = vadd.s32 %v191, %v193
    %vm197 = vc.u32 %v191, %v193
    %v198 = vadd.s32 %v194, 1
    %v199 = vsel %vm197, %v198, %v194
    %v200 = vadd.s32 %v195, %v199
    %v201 = vadd.s32 %v200, 536870912
    %v202 = vshrl.u32 %v201, 30
    %v203 = vshll.u32 %v202, 30
    %v204 = vsub.s32 %v200, %v203
    %vm205 = vcmp.lt.s32.totalorder %v204, 0
    %v206 = vsub.s32 0, %v204
    %v207 = vsel %vm205, %v206, %v204
    %v208 = vclz %v207
    %v209 = vsub.s32 %v208, 2
    %vm210 = vcmp.gt.s32.totalorder 0, %v209
    %v211 = vsel %vm210, 0, %v209
    %v212 = vsub.s32 32, %v211
    %v213 = vshll.u32 %v204, %v211
    %v214 = vshrl.u32 %v196, %v212
    %v215 = vor.u32 %v213, %v214
    %v216 = vsub.s32 4294967266, %v211
    %v217 = vadd.s32 %v216, 127
    %v218 = vshll.u32 %v217, 23
    %v219 = vor.u32 4788187, %v218
    %v220 = vand.u32 2147483647, %v219
    %v222 = vcvt.s32.f32 %v215
    %v223 = vmul.f32 %v222, %v220
    %v224 = vxor.u32 %v223, 2147483648
    %v225 = vsel %vm142, %v224, %v223
    %v226 = vsub.s32 4, %v202
    %v227 = vsel %vm142, %v226, %v202
    %v228 = vsel %vm141, %v132, %v225
    %v229 = vsel %vm141, 0, %v227
    %v230 = vcosq.f32.pop %v228
    %v231 = vsinq.f32.pop %v228
    %vm232 = vweird.f32 %v132
    %v233 = vand.u32 %v229, 3
    %vm234 = vcmp.lt.s32.totalorder %v233, 2
    %vm235 = vcmp.eq.s32.totalorder %v233, 0
    %v236 = vxor.u32 %v231, 2147483648
    %v237 = vsel %vm235, %v230, %v236
    %vm238 = vcmp.eq.s32.totalorder %v233, 2
    %v239 = vxor.u32 %v230, 2147483648
    %v240 = vsel %vm238, %v239, %v231
    %v241 = vsel %vm234, %v237, %v240
    %v242 = vsel %vm232, nan, %v241
    %v243 = vand.u32 2147483647, %v137
    %vm244 = vcmp.le.f32.partialorder %v243, 0.7853982
    %vm245 = vcmp.lt.s32.totalorder %v137, 0
    %v246 = vand.u32 %v137, 2139095040
    %v247 = vshrl.u32 %v246, 23
    %v248 = vsub.s32 %v247, 127
    %v249 = vand.u32 2147483647, %v137
    %v250 = vand.u32 %v249, 8388607
    %v251 = vor.u32 %v250, 8388608
    %v252 = vsub.s32 0, %v251
    %v253 = vadd.s32 %v248, 1
    %vm254 = vcmp.gt.s32.totalorder %v253, 0
    %v255 = vsel %vm254, %v253, 0
    %v256 = vshrl.u32 %v255, 5
    %v257 = vand.u32 %v255, 31
    %v258 = vsub.s32 32, %v257
    %v259 = vshrl.u32 683565275, %v258
    %v260 = vshll.u32 683565275, %v257
    %v261 = vshrl.u32 2475754826, %v258
    %v262 = vor.u32 %v260, %v261
    %v263 = vshll.u32 2475754826, %v257
    %v264 = vshrl.u32 2131351028, %v258
    %v265 = vor.u32 %v263, %v264
    %v266 = vshll.u32 2131351028, %v257
    %v267 = vshrl.u32 2102212464, %v258
    %v268 = vor.u32 %v266, %v267
    %v269 = vshll.u32 2102212464, %v257
    %v270 = vshrl.u32 920167782, %v258
    %v271 = vor.u32 %v269, %v270
    %v272 = vshll.u32 920167782, %v257
    %v273 = vshrl.u32 1326507024, %v258
    %v274 = vor.u32 %v272, %v273
    %vm275 = vcmp.lt.s32.totalorder %v256, 1
    %vm276 = vcmp.lt.s32.totalorder %v256, 2
    %vm277 = vcmp.lt.s32.totalorder %v256, 3
    %vm278 = vcmp.lt.s32.totalorder %v256, 4
    %v279 = vsel %vm275, %v259, %v262
    %v280 = vsel %vm278, %v268, 2102212464
    %v281 = vsel %vm277, %v265, %v280
    %v282 = vsel %vm276, %v279, %v281
    %v283 = vsel %vm275, %v262, %v265
    %v284 = vsel %vm278, %v271, 920167782
    %v285 = vsel %vm277, %v268, %v284
    %v286 = vsel %vm276, %v283, %v285
    %v287 = vsel %vm275, %v265, %v268
    %v288 = vsel %vm278, %v274, 1326507024
    %v289 = vsel %vm277, %v271, %v288
    %v290 = vsel %vm276, %v287, %v289
    %v291 = vshll.u32 %v251, 8
    %v292 = vmul.u32.u64.compose %v291, %v290
    %v293 = vextract.low.u32 %v292
    %v294 = vextract.high.u32 %v292
    %v295 = vmul.u32.u64.compose %v291, %v286
    %v296 = vextract.low.u32 %v295
    %v297 = vextract.high.u32 %v295
    %v298 = vmul.u32 %v291, %v282
    %v299 = vadd.s32 %v294, %v296
    %vm300 = vc.u32 %v294, %v296
    %v301 = vadd.s32 %v297, 1
    %v302 = vsel %vm300, %v301, %v297
    %v303 = vadd.s32 %v298, %v302
    %v304 = vadd.s32 %v303, 536870912
    %v305 = vshrl.u32 %v304, 30
    %v306 = vshll.u32 %v305, 30
    %v307 = vsub.s32 %v303, %v306
    %vm308 = vcmp.lt.s32.totalorder %v307, 0
    %v309 = vsub.s32 0, %v307
    %v310 = vsel %vm308, %v309, %v307
    %v311 = vclz %v310
    %v312 = vsub.s32 %v311, 2
    %vm313 = vcmp.gt.s32.totalorder 0, %v312
    %v314 = vsel %vm313, 0, %v312
    %v315 = vsub.s32 32, %v314
    %v316 = vshll.u32 %v307, %v314
    %v317 = vshrl.u32 %v299, %v315
    %v318 = vor.u32 %v316, %v317
    %v319 = vsub.s32 4294967266, %v314
    %v320 = vadd.s32 %v319, 127
    %v321 = vshll.u32 %v320, 23
    %v322 = vor.u32 4788187, %v321
    %v323 = vand.u32 2147483647, %v322
    %v325 = vcvt.s32.f32 %v318
    %v326 = vmul.f32 %v325, %v323
    %v327 = vxor.u32 %v326, 2147483648
    %v328 = vsel %vm245, %v327, %v326
    %v329 = vsub.s32 4, %v305
    %v330 = vsel %vm245, %v329, %v305
    %v331 = vsel %vm244, %v137, %v328
    %v332 = vsel %vm244, 0, %v330
    %v333 = vcosq.f32.pop %v331
    %v334 = vsinq.f32.pop %v331
    %vm335 = vweird.f32 %v137
    %v336 = vand.u32 %v332, 3
    %vm337 = vcmp.lt.s32.totalorder %v336, 2
    %vm338 = vcmp.eq.s32.totalorder %v336, 0
    %v339 = vxor.u32 %v334, 2147483648
    %v340 = vsel %vm338, %v333, %v339
    %vm341 = vcmp.eq.s32.totalorder %v336, 2
    %v342 = vxor.u32 %v333, 2147483648
    %v343 = vsel %vm341, %v342, %v334
    %v344 = vsel %vm337, %v340, %v343
    %v345 = vsel %vm335, nan, %v344
    %346 = vst [vmem:[#allocation2] sm:$0xff] %v242
    %347 = vst [vmem:[#allocation2 + $0x8] sm:$0xff] %v345
    %v348 = vand.u32 2147483647, %v132
    %vm349 = vcmp.le.f32.partialorder %v348, 0.7853982
    %vm350 = vcmp.lt.s32.totalorder %v132, 0
    %v351 = vand.u32 %v132, 2139095040
    %v352 = vshrl.u32 %v351, 23
    %v353 = vsub.s32 %v352, 127
    %v354 = vand.u32 2147483647, %v132
    %v355 = vand.u32 %v354, 8388607
    %v356 = vor.u32 %v355, 8388608
    %v357 = vsub.s32 0, %v356
    %v358 = vadd.s32 %v353, 1
    %vm359 = vcmp.gt.s32.totalorder %v358, 0
    %v360 = vsel %vm359, %v358, 0
    %v361 = vshrl.u32 %v360, 5
    %v362 = vand.u32 %v360, 31
    %v363 = vsub.s32 32, %v362
    %v364 = vshrl.u32 683565275, %v363
    %v365 = vshll.u32 683565275, %v362
    %v366 = vshrl.u32 2475754826, %v363
    %v367 = vor.u32 %v365, %v366
    %v368 = vshll.u32 2475754826, %v362
    %v369 = vshrl.u32 2131351028, %v363
    %v370 = vor.u32 %v368, %v369
    %v371 = vshll.u32 2131351028, %v362
    %v372 = vshrl.u32 2102212464, %v363
    %v373 = vor.u32 %v371, %v372
    %v374 = vshll.u32 2102212464, %v362
    %v375 = vshrl.u32 920167782, %v363
    %v376 = vor.u32 %v374, %v375
    %v377 = vshll.u32 920167782, %v362
    %v378 = vshrl.u32 1326507024, %v363
    %v379 = vor.u32 %v377, %v378
    %vm380 = vcmp.lt.s32.totalorder %v361, 1
    %vm381 = vcmp.lt.s32.totalorder %v361, 2
    %vm382 = vcmp.lt.s32.totalorder %v361, 3
    %vm383 = vcmp.lt.s32.totalorder %v361, 4
    %v384 = vsel %vm380, %v364, %v367
    %v385 = vsel %vm383, %v373, 2102212464
    %v386 = vsel %vm382, %v370, %v385
    %v387 = vsel %vm381, %v384, %v386
    %v388 = vsel %vm380, %v367, %v370
    %v389 = vsel %vm383, %v376, 920167782
    %v390 = vsel %vm382, %v373, %v389
    %v391 = vsel %vm381, %v388, %v390
    %v392 = vsel %vm380, %v370, %v373
    %v393 = vsel %vm383, %v379, 1326507024
    %v394 = vsel %vm382, %v376, %v393
    %v395 = vsel %vm381, %v392, %v394
    %v396 = vshll.u32 %v356, 8
    %v397 = vmul.u32.u64.compose %v396, %v395
    %v398 = vextract.low.u32 %v397
    %v399 = vextract.high.u32 %v397
    %v400 = vmul.u32.u64.compose %v396, %v391
    %v401 = vextract.low.u32 %v400
    %v402 = vextract.high.u32 %v400
    %v403 = vmul.u32 %v396, %v387
    %v404 = vadd.s32 %v399, %v401
    %vm405 = vc.u32 %v399, %v401
    %v406 = vadd.s32 %v402, 1
    %v407 = vsel %vm405, %v406, %v402
    %v408 = vadd.s32 %v403, %v407
    %v409 = vadd.s32 %v408, 536870912
    %v410 = vshrl.u32 %v409, 30
    %v411 = vshll.u32 %v410, 30
    %v412 = vsub.s32 %v408, %v411
    %vm413 = vcmp.lt.s32.totalorder %v412, 0
    %v414 = vsub.s32 0, %v412
    %v415 = vsel %vm413, %v414, %v412
    %v416 = vclz %v415
    %v417 = vsub.s32 %v416, 2
    %vm418 = vcmp.gt.s32.totalorder 0, %v417
    %v419 = vsel %vm418, 0, %v417
    %v420 = vsub.s32 32, %v419
    %v421 = vshll.u32 %v412, %v419
    %v422 = vshrl.u32 %v404, %v420
    %v423 = vor.u32 %v421, %v422
    %v424 = vsub.s32 4294967266, %v419
    %v425 = vadd.s32 %v424, 127
    %v426 = vshll.u32 %v425, 23
    %v427 = vor.u32 4788187, %v426
    %v428 = vand.u32 2147483647, %v427
    %v430 = vcvt.s32.f32 %v423
    %v431 = vmul.f32 %v430, %v428
    %v432 = vxor.u32 %v431, 2147483648
    %v433 = vsel %vm350, %v432, %v431
    %v434 = vsub.s32 4, %v410
    %v435 = vsel %vm350, %v434, %v410
    %v436 = vsel %vm349, %v132, %v433
    %v437 = vsel %vm349, 0, %v435
    %v438 = vcosq.f32.pop %v436
    %v439 = vsinq.f32.pop %v436
    %vm440 = vweird.f32 %v132
    %v441 = vadd.s32 %v437, 3
    %v442 = vand.u32 %v441, 3
    %vm443 = vcmp.lt.s32.totalorder %v442, 2
    %vm444 = vcmp.eq.s32.totalorder %v442, 0
    %v445 = vxor.u32 %v439, 2147483648
    %v446 = vsel %vm444, %v438, %v445
    %vm447 = vcmp.eq.s32.totalorder %v442, 2
    %v448 = vxor.u32 %v438, 2147483648
    %v449 = vsel %vm447, %v448, %v439
    %v450 = vsel %vm443, %v446, %v449
    %v451 = vsel %vm440, nan, %v450
    %v452 = vand.u32 2147483647, %v137
    %vm453 = vcmp.le.f32.partialorder %v452, 0.7853982
    %vm454 = vcmp.lt.s32.totalorder %v137, 0
    %v455 = vand.u32 %v137, 2139095040
    %v456 = vshrl.u32 %v455, 23
    %v457 = vsub.s32 %v456, 127
    %v458 = vand.u32 2147483647, %v137
    %v459 = vand.u32 %v458, 8388607
    %v460 = vor.u32 %v459, 8388608
    %v461 = vsub.s32 0, %v460
    %v462 = vadd.s32 %v457, 1
    %vm463 = vcmp.gt.s32.totalorder %v462, 0
    %v464 = vsel %vm463, %v462, 0
    %v465 = vshrl.u32 %v464, 5
    %v466 = vand.u32 %v464, 31
    %v467 = vsub.s32 32, %v466
    %v468 = vshrl.u32 683565275, %v467
    %v469 = vshll.u32 683565275, %v466
    %v470 = vshrl.u32 2475754826, %v467
    %v471 = vor.u32 %v469, %v470
    %v472 = vshll.u32 2475754826, %v466
    %v473 = vshrl.u32 2131351028, %v467
    %v474 = vor.u32 %v472, %v473
    %v475 = vshll.u32 2131351028, %v466
    %v476 = vshrl.u32 2102212464, %v467
    %v477 = vor.u32 %v475, %v476
    %v478 = vshll.u32 2102212464, %v466
    %v479 = vshrl.u32 920167782, %v467
    %v480 = vor.u32 %v478, %v479
    %v481 = vshll.u32 920167782, %v466
    %v482 = vshrl.u32 1326507024, %v467
    %v483 = vor.u32 %v481, %v482
    %vm484 = vcmp.lt.s32.totalorder %v465, 1
    %vm485 = vcmp.lt.s32.totalorder %v465, 2
    %vm486 = vcmp.lt.s32.totalorder %v465, 3
    %vm487 = vcmp.lt.s32.totalorder %v465, 4
    %v488 = vsel %vm484, %v468, %v471
    %v489 = vsel %vm487, %v477, 2102212464
    %v490 = vsel %vm486, %v474, %v489
    %v491 = vsel %vm485, %v488, %v490
    %v492 = vsel %vm484, %v471, %v474
    %v493 = vsel %vm487, %v480, 920167782
    %v494 = vsel %vm486, %v477, %v493
    %v495 = vsel %vm485, %v492, %v494
    %v496 = vsel %vm484, %v474, %v477
    %v497 = vsel %vm487, %v483, 1326507024
    %v498 = vsel %vm486, %v480, %v497
    %v499 = vsel %vm485, %v496, %v498
    %v500 = vshll.u32 %v460, 8
    %v501 = vmul.u32.u64.compose %v500, %v499
    %v502 = vextract.low.u32 %v501
    %v503 = vextract.high.u32 %v501
    %v504 = vmul.u32.u64.compose %v500, %v495
    %v505 = vextract.low.u32 %v504
    %v506 = vextract.high.u32 %v504
    %v507 = vmul.u32 %v500, %v491
    %v508 = vadd.s32 %v503, %v505
    %vm509 = vc.u32 %v503, %v505
    %v510 = vadd.s32 %v506, 1
    %v511 = vsel %vm509, %v510, %v506
    %v512 = vadd.s32 %v507, %v511
    %v513 = vadd.s32 %v512, 536870912
    %v514 = vshrl.u32 %v513, 30
    %v515 = vshll.u32 %v514, 30
    %v516 = vsub.s32 %v512, %v515
    %vm517 = vcmp.lt.s32.totalorder %v516, 0
    %v518 = vsub.s32 0, %v516
    %v519 = vsel %vm517, %v518, %v516
    %v520 = vclz %v519
    %v521 = vsub.s32 %v520, 2
    %vm522 = vcmp.gt.s32.totalorder 0, %v521
    %v523 = vsel %vm522, 0, %v521
    %v524 = vsub.s32 32, %v523
    %v525 = vshll.u32 %v516, %v523
    %v526 = vshrl.u32 %v508, %v524
    %v527 = vor.u32 %v525, %v526
    %v528 = vsub.s32 4294967266, %v523
    %v529 = vadd.s32 %v528, 127
    %v530 = vshll.u32 %v529, 23
    %v531 = vor.u32 4788187, %v530
    %v532 = vand.u32 2147483647, %v531
    %v534 = vcvt.s32.f32 %v527
    %v535 = vmul.f32 %v534, %v532
    %v536 = vxor.u32 %v535, 2147483648
    %v537 = vsel %vm454, %v536, %v535
    %v538 = vsub.s32 4, %v514
    %v539 = vsel %vm454, %v538, %v514
    %v540 = vsel %vm453, %v137, %v537
    %v541 = vsel %vm453, 0, %v539
    %v542 = vcosq.f32.pop %v540
    %v543 = vsinq.f32.pop %v540
    %vm544 = vweird.f32 %v137
    %v545 = vadd.s32 %v541, 3
    %v546 = vand.u32 %v545, 3
    %vm547 = vcmp.lt.s32.totalorder %v546, 2
    %vm548 = vcmp.eq.s32.totalorder %v546, 0
    %v549 = vxor.u32 %v543, 2147483648
    %v550 = vsel %vm548, %v542, %v549
    %vm551 = vcmp.eq.s32.totalorder %v546, 2
    %v552 = vxor.u32 %v542, 2147483648
    %v553 = vsel %vm551, %v552, %v543
    %v554 = vsel %vm547, %v550, %v553
    %v555 = vsel %vm544, nan, %v554
    %556 = vst [vmem:[#allocation2 + $0x10] sm:$0xff] %v451
    %557 = vst [vmem:[#allocation2 + $0x18] sm:$0xff] %v555
    %v558 = vld [vmem:[%s2] sm:$0xff]
    %v559 = vld [vmem:[%s2 + $0x8] sm:$0xff]
    %v560 = vld [vmem:[%s2 + $0x10] sm:$0xff]
    %v561 = vld [vmem:[%s2 + $0x18] sm:$0xff]
    %v562 = vld [vmem:[#allocation2] sm:$0xff]
    %v563 = vld [vmem:[#allocation2 + $0x8] sm:$0xff]
    %v564 = vld [vmem:[#allocation2 + $0x10] sm:$0xff]
    %v565 = vld [vmem:[#allocation2 + $0x18] sm:$0xff]
    %v566 = vld [vmem:[%s3] sm:$0xff]
    %v567 = vld [vmem:[%s3 + $0x8] sm:$0xff]
    %v568 = vld [vmem:[%s3 + $0x10] sm:$0xff]
    %v569 = vld [vmem:[%s3 + $0x18] sm:$0xff]
    %571 = vset.pattern.permute.xlu0 0
    %572 = vperm.xlu0 %571, %v566
    %v573 = vpop.permute.xlu0 %572
    %576 = vset.pattern.permute.xlu0 0
    %577 = vperm.xlu0 %576, %v567
    %v578 = vpop.permute.xlu0 %577
    %581 = vset.pattern.permute.xlu0 0
    %582 = vperm.xlu0 %581, %v568
    %v583 = vpop.permute.xlu0 %582
    %586 = vset.pattern.permute.xlu0 0
    %587 = vperm.xlu0 %586, %v569
    %v588 = vpop.permute.xlu0 %587
    %v591 = vsel %vm58, %v558, 0
    %v594 = vsel %vm58, %v559, 0
    %v597 = vsel %vm58, %v560, 0
    %v600 = vsel %vm58, %v561, 0
    %602 = vmatprep.subr.mxu0 0.0
    %603 = vmatpush1.msra.mxu0 0.0
    %604 = vmatprep.subr.mxu0 0.0
    %605 = vmatpush1.msra.mxu0 0.0
    %606 = vmatprep.subr.mxu0 0.0
    %607 = vmatpush1.msra.mxu0 0.0
    %608 = vmatprep.subr.mxu0 0.0
    %609 = vmatpush1.msra.mxu0 0.0
    %610 = vmatprep.subr.mxu0 0.0
    %611 = vmatpush1.msra.mxu0 0.0
    %612 = vmatprep.subr.mxu0 0.0
    %613 = vmatpush1.msra.mxu0 0.0
    %614 = vmatprep.subr.mxu0 0.0
    %615 = vmatpush1.msra.mxu0 0.0
    %616 = vmatprep.subr.mxu0 0.0
    %617 = vmatpush1.msra.mxu0 0.0
    %618 = vmatprep.subr.mxu0 0.0
    %619 = vmatpush1.msra.mxu0 0.0
    %620 = vmatprep.subr.mxu0 0.0
    %621 = vmatpush1.msra.mxu0 0.0
    %622 = vmatprep.subr.mxu0 0.0
    %623 = vmatpush1.msra.mxu0 0.0
    %624 = vmatprep.subr.mxu0 0.0
    %625 = vmatpush1.msra.mxu0 0.0
    %626 = vmatprep.subr.mxu0 0.0
    %627 = vmatpush1.msra.mxu0 %v565
    %628 = vmatprep.subr.mxu0 0.0
    %629 = vmatpush1.msra.mxu0 %v564
    %630 = vmatprep.subr.mxu0 0.0
    %631 = vmatpush1.msra.mxu0 %v563
    %632 = vmatprep.subr.mxu0 0.0
    %633 = vmatpush1.msra.mxu0 %v562
    %634 = vmatprep.subr.mxu0 0.0
    %635 = vmatpush2.msra.mxu0 0.0
    %636 = vmatprep.subr.mxu0 0.0
    %637 = vmatpush2.msra.mxu0 0.0
    %638 = vmatprep.subr.mxu0 0.0
    %639 = vmatpush2.msra.mxu0 0.0
    %640 = vmatprep.subr.mxu0 0.0
    %641 = vmatpush2.msra.mxu0 0.0
    %642 = vmatprep.subr.mxu0 0.0
    %643 = vmatpush2.msra.mxu0 0.0
    %644 = vmatprep.subr.mxu0 0.0
    %645 = vmatpush2.msra.mxu0 0.0
    %646 = vmatprep.subr.mxu0 0.0
    %647 = vmatpush2.msra.mxu0 0.0
    %648 = vmatprep.subr.mxu0 0.0
    %649 = vmatpush2.msra.mxu0 0.0
    %650 = vmatprep.subr.mxu0 0.0
    %651 = vmatpush2.msra.mxu0 0.0
    %652 = vmatprep.subr.mxu0 0.0
    %653 = vmatpush2.msra.mxu0 0.0
    %654 = vmatprep.subr.mxu0 0.0
    %655 = vmatpush2.msra.mxu0 0.0
    %656 = vmatprep.subr.mxu0 0.0
    %657 = vmatpush2.msra.mxu0 0.0
    %658 = vmatprep.subr.mxu0 0.0
    %659 = vmatpush2.msra.mxu0 0.0
    %660 = vmatprep.subr.mxu0 0.0
    %661 = vmatpush2.msra.mxu0 0.0
    %662 = vmatprep.subr.mxu0 0.0
    %663 = vmatpush2.msra.mxu0 0.0
    %664 = vmatprep.subr.mxu0 0.0
    %665 = vmatpush2.msra.mxu0 0.0
    %666 = vmatprep.mubr.f32.mxu0 0.0
    %667 = vmatmul.mubr.f32.gmra.mxu0 %v591
    %v668 = vpop.f32.mrf.mxu0
    %v669 = vadd.f32 %v573, %v668
    %v670 = vpop.f32.mrf.mxu0
    %671 = vmatprep.mubr.f32.mxu0 0.0
    %672 = vmatmul.mubr.f32.gmra.mxu0 %v594
    %v673 = vpop.f32.mrf.mxu0
    %v674 = vadd.f32 %v578, %v673
    %v675 = vpop.f32.mrf.mxu0
    %676 = vmatprep.mubr.f32.mxu0 0.0
    %677 = vmatmul.mubr.f32.gmra.mxu0 %v597
    %v678 = vpop.f32.mrf.mxu0
    %v679 = vadd.f32 %v583, %v678
    %v680 = vpop.f32.mrf.mxu0
    %681 = vmatprep.mubr.f32.mxu0 0.0
    %682 = vmatmul.mubr.f32.gmra.mxu0 %v600
    %v683 = vpop.f32.mrf.mxu0
    %v684 = vadd.f32 %v588, %v683
    %v685 = vpop.f32.mrf.mxu0
    %686 = vdwg.mxu0
    %v687 = vmul.f32 %v669, %v669
    %v688 = vmul.f32 %v674, %v674
    %v689 = vmul.f32 %v679, %v679
    %v690 = vmul.f32 %v684, %v684
    %v691 = vmul.f32 %v669, %v687
    %v692 = vmul.f32 %v674, %v688
    %v693 = vmul.f32 %v679, %v689
    %v694 = vmul.f32 %v684, %v690
    %v695 = vmul.f32 %v691, 0.044715
    %v696 = vmul.f32 %v692, 0.044715
    %v697 = vmul.f32 %v693, 0.044715
    %v698 = vmul.f32 %v694, 0.044715
    %v699 = vadd.f32 %v669, %v695
    %v700 = vadd.f32 %v674, %v696
    %v701 = vadd.f32 %v679, %v697
    %v702 = vadd.f32 %v684, %v698
    %v703 = vmul.f32 %v699, 0.7978846
    %v704 = vmul.f32 %v700, 0.7978846
    %v705 = vmul.f32 %v701, 0.7978846
    %v706 = vmul.f32 %v702, 0.7978846
    %v707 = vtanh.pop %v703
    %v708 = vtanh.pop %v704
    %v709 = vtanh.pop %v705
    %v710 = vtanh.pop %v706
    %v711 = vadd.f32 %v707, 1.0
    %v712 = vadd.f32 %v708, 1.0
    %v713 = vadd.f32 %v709, 1.0
    %v714 = vadd.f32 %v710, 1.0
    %v715 = vmul.f32 %v711, 0.5
    %v716 = vmul.f32 %v712, 0.5
    %v717 = vmul.f32 %v713, 0.5
    %v718 = vmul.f32 %v714, 0.5
    %v719 = vmul.f32 %v669, %v715
    %v720 = vmul.f32 %v674, %v716
    %v721 = vmul.f32 %v679, %v717
    %v722 = vmul.f32 %v684, %v718
    %v723 = vld [vmem:[#allocation6] sm:$0xff]
    %v724 = vld [vmem:[#allocation6 + $0x8] sm:$0xff]
    %v725 = vld [vmem:[#allocation6 + $0x10] sm:$0xff]
    %v726 = vld [vmem:[#allocation6 + $0x18] sm:$0xff]
    %v727 = vld [vmem:[%s5] sm:$0xff]
    %v728 = vld [vmem:[%s5 + $0x8] sm:$0xff]
    %v729 = vld [vmem:[%s5 + $0x10] sm:$0xff]
    %v730 = vld [vmem:[%s5 + $0x18] sm:$0xff]
    %732 = vset.pattern.permute.xlu0 0
    %733 = vperm.xlu0 %732, %v727
    %v734 = vpop.permute.xlu0 %733
    %737 = vset.pattern.permute.xlu0 0
    %738 = vperm.xlu0 %737, %v728
    %v739 = vpop.permute.xlu0 %738
    %742 = vset.pattern.permute.xlu0 0
    %743 = vperm.xlu0 %742, %v729
    %v744 = vpop.permute.xlu0 %743
    %747 = vset.pattern.permute.xlu0 0
    %748 = vperm.xlu0 %747, %v730
    %v749 = vpop.permute.xlu0 %748
    %v752 = vsel %vm58, %v723, 0
    %v755 = vsel %vm58, %v724, 0
    %v758 = vsel %vm58, %v725, 0
    %v761 = vsel %vm58, %v726, 0
    %763 = vmatprep.subr.mxu0 0.0
    %764 = vmatpush1.msra.mxu0 0.0
    %765 = vmatprep.subr.mxu0 0.0
    %766 = vmatpush1.msra.mxu0 0.0
    %767 = vmatprep.subr.mxu0 0.0
    %768 = vmatpush1.msra.mxu0 0.0
    %769 = vmatprep.subr.mxu0 0.0
    %770 = vmatpush1.msra.mxu0 0.0
    %771 = vmatprep.subr.mxu0 0.0
    %772 = vmatpush1.msra.mxu0 0.0
    %773 = vmatprep.subr.mxu0 0.0
    %774 = vmatpush1.msra.mxu0 0.0
    %775 = vmatprep.subr.mxu0 0.0
    %776 = vmatpush1.msra.mxu0 0.0
    %777 = vmatprep.subr.mxu0 0.0
    %778 = vmatpush1.msra.mxu0 0.0
    %779 = vmatprep.subr.mxu0 0.0
    %780 = vmatpush1.msra.mxu0 0.0
    %781 = vmatprep.subr.mxu0 0.0
    %782 = vmatpush1.msra.mxu0 0.0
    %783 = vmatprep.subr.mxu0 0.0
    %784 = vmatpush1.msra.mxu0 0.0
    %785 = vmatprep.subr.mxu0 0.0
    %786 = vmatpush1.msra.mxu0 0.0
    %787 = vmatprep.subr.mxu0 0.0
    %788 = vmatpush1.msra.mxu0 %v722
    %789 = vmatprep.subr.mxu0 0.0
    %790 = vmatpush1.msra.mxu0 %v721
    %791 = vmatprep.subr.mxu0 0.0
    %792 = vmatpush1.msra.mxu0 %v720
    %793 = vmatprep.subr.mxu0 0.0
    %794 = vmatpush1.msra.mxu0 %v719
    %795 = vmatprep.subr.mxu0 0.0
    %796 = vmatpush2.msra.mxu0 0.0
    %797 = vmatprep.subr.mxu0 0.0
    %798 = vmatpush2.msra.mxu0 0.0
    %799 = vmatprep.subr.mxu0 0.0
    %800 = vmatpush2.msra.mxu0 0.0
    %801 = vmatprep.subr.mxu0 0.0
    %802 = vmatpush2.msra.mxu0 0.0
    %803 = vmatprep.subr.mxu0 0.0
    %804 = vmatpush2.msra.mxu0 0.0
    %805 = vmatprep.subr.mxu0 0.0
    %806 = vmatpush2.msra.mxu0 0.0
    %807 = vmatprep.subr.mxu0 0.0
    %808 = vmatpush2.msra.mxu0 0.0
    %809 = vmatprep.subr.mxu0 0.0
    %810 = vmatpush2.msra.mxu0 0.0
    %811 = vmatprep.subr.mxu0 0.0
    %812 = vmatpush2.msra.mxu0 0.0
    %813 = vmatprep.subr.mxu0 0.0
    %814 = vmatpush2.msra.mxu0 0.0
    %815 = vmatprep.subr.mxu0 0.0
    %816 = vmatpush2.msra.mxu0 0.0
    %817 = vmatprep.subr.mxu0 0.0
    %818 = vmatpush2.msra.mxu0 0.0
    %819 = vmatprep.subr.mxu0 0.0
    %820 = vmatpush2.msra.mxu0 0.0
    %821 = vmatprep.subr.mxu0 0.0
    %822 = vmatpush2.msra.mxu0 0.0
    %823 = vmatprep.subr.mxu0 0.0
    %824 = vmatpush2.msra.mxu0 0.0
    %825 = vmatprep.subr.mxu0 0.0
    %826 = vmatpush2.msra.mxu0 0.0
    %827 = vmatprep.mubr.f32.mxu0 0.0
    %828 = vmatmul.mubr.f32.gmra.mxu0 %v752
    %v829 = vpop.f32.mrf.mxu0
    %v830 = vadd.f32 %v734, %v829
    %v831 = vpop.f32.mrf.mxu0
    %832 = vmatprep.mubr.f32.mxu0 0.0
    %833 = vmatmul.mubr.f32.gmra.mxu0 %v755
    %v834 = vpop.f32.mrf.mxu0
    %v835 = vadd.f32 %v739, %v834
    %v836 = vpop.f32.mrf.mxu0
    %837 = vmatprep.mubr.f32.mxu0 0.0
    %838 = vmatmul.mubr.f32.gmra.mxu0 %v758
    %v839 = vpop.f32.mrf.mxu0
    %v840 = vadd.f32 %v744, %v839
    %v841 = vpop.f32.mrf.mxu0
    %842 = vmatprep.mubr.f32.mxu0 0.0
    %843 = vmatmul.mubr.f32.gmra.mxu0 %v761
    %v844 = vpop.f32.mrf.mxu0
    %v845 = vadd.f32 %v749, %v844
    %v846 = vpop.f32.mrf.mxu0
    %847 = vdwg.mxu0
    %848 = vst [vmem:[#allocation8] sm:$0xff] %v830
    %849 = vst [vmem:[#allocation8 + $0x8] sm:$0xff] %v835
    %850 = vst [vmem:[#allocation8 + $0x10] sm:$0xff] %v840
    %851 = vst [vmem:[#allocation8 + $0x18] sm:$0xff] %v845
    // Predicated region
    $region34: #{tpu_custom_call.1} parent=1 // pred_check
      _
    $region35: #{tpu_custom_call.1} parent=1 // pred_check_branch
      %853 = sbr.rel (0) target = $region37
    $region36: #{tpu_custom_call.1} parent=1 // pred_region
      %s855 = ssub.s32 512, 512
      %856 = vsyncadd [#allocation5], %s855
      %s857 = sshll.u32 [#allocation8], 4
      %s858 = int_to_ptr.vmem [resolvable:$true] %s857
      %863 = dma.vmem_to_hbm [thread:$0]  %s858, 512, %s6, [#allocation5], 128, 128, 8
    $region37: #{tpu_custom_call.1} parent=1 // pred_fallthru
      _
    // Predicated region
    $region38: #{tpu_custom_call.1} parent=1 // pred_check
      _
    $region39: #{tpu_custom_call.1} parent=1 // pred_check_branch
      %865 = sbr.rel (0) target = $region41
    $region40: #{tpu_custom_call.1} parent=1 // pred_region
      %866 = dma.done [#allocation5], 512
    $region41: #{tpu_custom_call.1} parent=1 // pred_fallthru
      _
    %867 = vsyncpa [#allocation4], 1
    %868 = vsyncpa [#allocation7], 1
    %869 = vsyncpa [#allocation5], 1

</llo_original>
